<compile_context>
chip_gen: v5e
topology: v5e:2x2
jax: 0.10.0
libtpu: 0.0.40
codegen_flags: <defaults>
</compile_context>

<pallas_src>
import functools

import jax
import jax.numpy as jnp
from jax.experimental import pallas as pl
from jax.experimental.pallas import tpu as pltpu

LN_EPS = 1e-5


def fused_encoder_kernel(x_ref, wqkv_ref, wo_ref, w1_ref, w2_ref,
                         bqkv_ref, vecd_ref, b1_ref, o_ref,
                         *, batch, seq, nhead):
    """Grid step = (batch block, layer): one encoder layer on one (N, D) tile."""
    layer = pl.program_id(1)

    # Load this batch block's activations into the resident output block once.
    @pl.when(layer == 0)
    def _():
        o_ref[...] = x_ref[...]

    x = o_ref[...]                               # (N, D) f32 carry, N = batch*seq
    N, D = x.shape
    H = nhead
    hd = D // H
    B, L = batch, seq

    # ---------------- fused lane-dense QKV projection ----------------
    # (N, D) @ (D, 3D) -> (N, 3D), f32 accumulate; 1/sqrt(hd) folded into q.
    qkv = jnp.dot(x.astype(jnp.bfloat16), wqkv_ref[...],
                  preferred_element_type=jnp.float32) + bqkv_ref[...]
    qkv = qkv.astype(jnp.bfloat16)

    # ---------------- split heads into a leading batch dim ----------------
    # Static lane slices of width hd + leading-dim stack/reshape only
    # (no H-way activation broadcast, no transposes).
    def heads(base):
        cols = [qkv[:, base + h * hd: base + (h + 1) * hd].reshape(B, L, hd)
                for h in range(H)]
        return jnp.stack(cols, axis=0).reshape(H * B, L, hd)     # (H*B, L, hd)

    qg = heads(0)
    kg = heads(D)
    vg = heads(2 * D)

    # ---------------- attention, batched over (head, batch) groups ----------------
    # TODO(synk): for long sequences (L >~ 256) switch to KV-blocked online
    # softmax instead of materializing the full (H*B, L, L) score tensor.
    s = jnp.einsum('gqf,gkf->gqk', qg, kg,
                   preferred_element_type=jnp.float32)           # (H*B, L, L) f32
    s = s - jnp.max(s, axis=-1, keepdims=True)
    p = jnp.exp(s)
    p = p * pl.reciprocal(jnp.sum(p, axis=-1, keepdims=True), approx=True)
    og = jnp.einsum('gqk,gkf->gqf', p.astype(jnp.bfloat16), vg,
                    preferred_element_type=jnp.float32)          # (H*B, L, hd)
    og = og.astype(jnp.bfloat16)

    # -------- merge heads back to lanes; single (N, D) @ (D, D) out-projection --------
    oh = og.reshape(H, N, hd)                                    # leading-dim reshape
    ctx = jnp.concatenate([oh[h] for h in range(H)], axis=-1)    # (N, D) bf16
    attn = jnp.dot(ctx, wo_ref[...], preferred_element_type=jnp.float32)

    vec = vecd_ref[...]                          # (6, D): bo, g1, be1, b2, g2, be2
    attn = attn + vec[0:1]

    # ---------------- add & LayerNorm 1 (f32 statistics) ----------------
    y = x + attn
    mu = jnp.mean(y, axis=-1, keepdims=True)
    var = jnp.mean((y - mu) ** 2, axis=-1, keepdims=True)
    y = (y - mu) * jax.lax.rsqrt(var + LN_EPS) * vec[1:2] + vec[2:3]

    # ---------------- feed-forward (ReLU), bf16 MXU matmuls ----------------
    # TODO(synk): at production sizes tile this over N row blocks (128-512) and/or
    # stream w1/w2 over an extra grid axis to bound the (rows, F) f32 live range.
    ff = jnp.dot(y.astype(jnp.bfloat16), w1_ref[...],
                 preferred_element_type=jnp.float32) + b1_ref[...]
    ff = jnp.maximum(ff, 0.0)
    ff = jnp.dot(ff.astype(jnp.bfloat16), w2_ref[...],
                 preferred_element_type=jnp.float32) + vec[3:4]

    # ---------------- add & LayerNorm 2 (f32 statistics) ----------------
    z = y + ff
    mu2 = jnp.mean(z, axis=-1, keepdims=True)
    var2 = jnp.mean((z - mu2) ** 2, axis=-1, keepdims=True)
    z = (z - mu2) * jax.lax.rsqrt(var2 + LN_EPS) * vec[4:5] + vec[5:6]

    # Single store per layer: o_ref is the VMEM-resident carry; HBM writeback
    # happens only once per batch block, after the last layer.
    o_ref[...] = z


def fused_encoder(x, packed, *, nhead, batch_blocks=None):
    """Apply all encoder layers to x (B, L, D) with a single Pallas call."""
    B, L, D = x.shape
    N = B * L
    (wqkv, wo, w1, w2, bqkv, vecd, b1) = packed
    nlayers = wqkv.shape[0]
    F = w1.shape[-1]

    # Batch-block ("parallel") axis: shards across TensorCores (v7x megacore)
    # and bounds per-block activation VMEM. Fall back to a single block if the
    # resulting row count would violate the (8, 128) block constraint.
    if batch_blocks is None:
        batch_blocks = 2 if (B % 2 == 0 and B >= 2) else 1
    if B % batch_blocks != 0 or ((B // batch_blocks) * L) % 8 != 0:
        batch_blocks = 1
    bblk = B // batch_blocks
    bN = bblk * L

    x2 = x.reshape(N, D).astype(jnp.float32)     # lane-dense flat activation slab

    kernel = functools.partial(fused_encoder_kernel, batch=bblk, seq=L, nhead=nhead)

    def layer_spec(shape):
        nd = len(shape)
        return pl.BlockSpec((pl.Squeezed(),) + tuple(shape[1:]),
                            lambda b, l, _nd=nd: (l,) + (0,) * (_nd - 1))

    in_specs = [pl.BlockSpec((bN, D), lambda b, l: (b, 0))]
    in_specs += [layer_spec(p.shape) for p in (wqkv, wo, w1, w2, bqkv, vecd, b1)]

    flops = int(nlayers * (8 * N * D * D + 4 * N * L * D + 4 * N * D * F))
    transcendentals = int(nlayers * (B * nhead * L * L + 2 * N))
    bytes_accessed = int(2 * N * D * 4
                         + sum(int(p.size) * p.dtype.itemsize for p in packed))

    out = pl.pallas_call(
        kernel,
        out_shape=jax.ShapeDtypeStruct((N, D), jnp.float32),
        grid=(batch_blocks, nlayers),
        in_specs=in_specs,
        out_specs=pl.BlockSpec((bN, D), lambda b, l: (b, 0)),
        input_output_aliases={0: 0},             # activations carried in-place
        compiler_params=pltpu.CompilerParams(
            dimension_semantics=("parallel", "arbitrary")),
        cost_estimate=pl.CostEstimate(flops=flops,
                                      transcendentals=transcendentals,
                                      bytes_accessed=bytes_accessed),
    )(x2, wqkv, wo, w1, w2, bqkv, vecd, b1)

    return out.reshape(B, L, D)


def init_layer_params(key, d_model, dim_ff):
    """Canonical f32 per-layer params (x @ W convention), PyTorch-like init."""
    ks = jax.random.split(key, 8)
    s = 0.02
    return dict(
        wq=jax.random.normal(ks[0], (d_model, d_model), jnp.float32) * s,
        wk=jax.random.normal(ks[1], (d_model, d_model), jnp.float32) * s,
        wv=jax.random.normal(ks[2], (d_model, d_model), jnp.float32) * s,
        wo=jax.random.normal(ks[3], (d_model, d_model), jnp.float32) * s,
        w1=jax.random.normal(ks[4], (d_model, dim_ff), jnp.float32) * s,
        w2=jax.random.normal(ks[5], (dim_ff, d_model), jnp.float32) * s,
        bq=jax.random.normal(ks[6], (1, d_model), jnp.float32) * s,
        bk=jnp.zeros((1, d_model), jnp.float32),
        bv=jax.random.normal(ks[7], (1, d_model), jnp.float32) * s,
        bo=jnp.zeros((1, d_model), jnp.float32),
        b1=jnp.zeros((1, dim_ff), jnp.float32),
        b2=jnp.zeros((1, d_model), jnp.float32),
        g1=jnp.ones((1, d_model), jnp.float32),
        be1=jnp.zeros((1, d_model), jnp.float32),
        g2=jnp.ones((1, d_model), jnp.float32),
        be2=jnp.zeros((1, d_model), jnp.float32),
    )


def pack_params(layer_params, nhead):
    """Stack layers, fuse QKV into one (D, 3D) weight (q pre-scaled by 1/sqrt(hd)),
    cast matmul weights to bf16, pack tiny vectors into a few lane-dense arrays."""
    D = layer_params[0]['wq'].shape[0]
    hd = D // nhead
    scale = 1.0 / (hd ** 0.5)

    wqkv_s, wo_s, w1_s, w2_s, bqkv_s, vecd_s, b1_s = ([] for _ in range(7))
    for p in layer_params:
        wqkv_s.append(jnp.concatenate([p['wq'] * scale, p['wk'], p['wv']],
                                      axis=1).astype(jnp.bfloat16))          # (D, 3D)
        wo_s.append(p['wo'].astype(jnp.bfloat16))                            # (D, D)
        w1_s.append(p['w1'].astype(jnp.bfloat16))                            # (D, F)
        w2_s.append(p['w2'].astype(jnp.bfloat16))                            # (F, D)
        bqkv_s.append(jnp.concatenate([p['bq'] * scale, p['bk'], p['bv']],
                                      axis=1))                               # (1, 3D) f32
        vecd_s.append(jnp.concatenate([p['bo'], p['g1'], p['be1'],
                                       p['b2'], p['g2'], p['be2']], axis=0))  # (6, D)
        b1_s.append(p['b1'])                                                  # (1, F)

    stack = lambda xs: jnp.stack(xs, axis=0)
    return (stack(wqkv_s), stack(wo_s), stack(w1_s), stack(w2_s),
            stack(bqkv_s), stack(vecd_s), stack(b1_s))


def transformer_encoder_wrapper(xm, xa, cls_token, pos_embed, packed, *, nhead):
    """Forward pass matching TransformerEncoderWrapper.forward (eval mode)."""
    B = xm.shape[0]
    D = xm.shape[-1]
    cls = jnp.broadcast_to(cls_token, (B, 1, D))
    x = jnp.concatenate([cls, xm, xa], axis=1)           # (B, L, D)
    L = x.shape[1]
    x = x + pos_embed[:, :L, :]
    out = fused_encoder(x, packed, nhead=nhead)          # Pallas hot path
    return out[:, 0], out[:, 1:]


if __name__ == "__main__":
    # Small, module-consistent shapes (L = 1 + Lm + La = 8, B*L = 16).
    d_model, nhead, nlayers, dim_ff = 32, 4, 2, 64
    B, Lm, La = 2, 4, 3

    key = jax.random.PRNGKey(0)
    k_xm, k_xa, *k_layers = jax.random.split(key, 2 + nlayers)

    xm = jax.random.normal(k_xm, (B, Lm, d_model), jnp.float32)
    xa = jax.random.normal(k_xa, (B, La, d_model), jnp.float32)

    # Module init: cls_token and pos_embed are nn.Parameter(torch.zeros(...)).
    cls_token = jnp.zeros((1, 1, d_model), jnp.float32)
    pos_embed = jnp.zeros((1, 10000, d_model), jnp.float32)

    layer_params = [init_layer_params(k_layers[i], d_model, dim_ff)
                    for i in range(nlayers)]
    packed = pack_params(layer_params, nhead)

    fwd = jax.jit(functools.partial(transformer_encoder_wrapper, nhead=nhead))
    cls_out, seq_out = fwd(xm, xa, cls_token, pos_embed, packed)
    jax.block_until_ready((cls_out, seq_out))

    assert cls_out.shape == (B, d_model)
    assert seq_out.shape == (B, Lm + La, d_model)
    print("KERNEL_OK")
</pallas_src>

<mosaic_0001>
module attributes {stable_mosaic.version = 11 : i64} {
  func.func @fused_encoder_kernel(%arg0: i32, %arg1: i32, %arg2: memref<8x32xf32, #tpu.memory_space<vmem>>, %arg3: memref<1x32x96xbf16, #tpu.memory_space<vmem>>, %arg4: memref<1x32x32xbf16, #tpu.memory_space<vmem>>, %arg5: memref<1x32x64xbf16, #tpu.memory_space<vmem>>, %arg6: memref<1x64x32xbf16, #tpu.memory_space<vmem>>, %arg7: memref<1x1x96xf32, #tpu.memory_space<vmem>>, %arg8: memref<1x6x32xf32, #tpu.memory_space<vmem>>, %arg9: memref<1x1x64xf32, #tpu.memory_space<vmem>>, %arg10: memref<8x32xf32, #tpu.memory_space<vmem>>) attributes {dimension_semantics = [#tpu.dimension_semantics<parallel>, #tpu.dimension_semantics<arbitrary>], iteration_bounds = array<i64: 2, 2>, scalar_prefetch = 0 : i64, scratch_operands = 0 : i64, tpu.core_type = #tpu.core_type<tc>, window_params = [{transform_indices = @transform_0, window_bounds = array<i64: 8, 32>}, {transform_indices = @transform_1, window_bounds = array<i64: 1, 32, 96>}, {transform_indices = @transform_2, window_bounds = array<i64: 1, 32, 32>}, {transform_indices = @transform_3, window_bounds = array<i64: 1, 32, 64>}, {transform_indices = @transform_4, window_bounds = array<i64: 1, 64, 32>}, {transform_indices = @transform_5, window_bounds = array<i64: 1, 1, 96>}, {transform_indices = @transform_6, window_bounds = array<i64: 1, 6, 32>}, {transform_indices = @transform_7, window_bounds = array<i64: 1, 1, 64>}, {transform_indices = @transform_8, window_bounds = array<i64: 8, 32>}]} {
    %c0_i32 = arith.constant 0 : i32
    %0 = arith.cmpi eq, %arg1, %c0_i32 : i32
    %1 = arith.extui %0 : i1 to i32
    %c0_i32_0 = arith.constant 0 : i32
    %2 = arith.cmpi ne, %1, %c0_i32_0 : i32
    scf.if %2 {
      %c0_43 = arith.constant 0 : index
      %c0_44 = arith.constant 0 : index
      %154 = vector.load %arg2[%c0_43, %c0_44] : memref<8x32xf32, #tpu.memory_space<vmem>>, vector<8x32xf32>
      %c0_45 = arith.constant 0 : index
      %c0_46 = arith.constant 0 : index
      %155 = vector.load %arg10[%c0_45, %c0_46] : memref<8x32xf32, #tpu.memory_space<vmem>>, vector<8x32xf32>
      tpu.vector_store %arg10[%c0_45, %c0_46], %154 {strides = array<i32>} : memref<8x32xf32, #tpu.memory_space<vmem>>, vector<8x32xf32>,
    } else {
    }
    %c0 = arith.constant 0 : index
    %c0_1 = arith.constant 0 : index
    %3 = vector.load %arg10[%c0, %c0_1] : memref<8x32xf32, #tpu.memory_space<vmem>>, vector<8x32xf32>
    %4 = arith.truncf %3 : vector<8x32xf32> to vector<8x32xbf16>
    %c0_2 = arith.constant 0 : index
    %c0_3 = arith.constant 0 : index
    %c0_4 = arith.constant 0 : index
    %5 = vector.load %arg3[%c0_2, %c0_3, %c0_4] : memref<1x32x96xbf16, #tpu.memory_space<vmem>>, vector<1x32x96xbf16>
    %6 = vector.shape_cast %5 : vector<1x32x96xbf16> to vector<32x96xbf16>
    %cst = arith.constant dense<0.000000e+00> : vector<8x96xf32>
    %7 = tpu.matmul %4, %6, %cst {dimension_numbers = #tpu.dot_dimension_numbers<[1], [0], [0], [1], [0, 0, 1, 1], [], []>} : vector<8x32xbf16>, vector<32x96xbf16>, vector<8x96xf32> -> vector<8x96xf32>
    %c0_5 = arith.constant 0 : index
    %c0_6 = arith.constant 0 : index
    %c0_7 = arith.constant 0 : index
    %8 = vector.load %arg7[%c0_5, %c0_6, %c0_7] : memref<1x1x96xf32, #tpu.memory_space<vmem>>, vector<1x1x96xf32>
    %9 = vector.shape_cast %8 : vector<1x1x96xf32> to vector<1x96xf32>
    %10 = vector.broadcast %9 : vector<1x96xf32> to vector<8x96xf32>
    %11 = arith.addf %7, %10 : vector<8x96xf32>
    %12 = arith.truncf %11 : vector<8x96xf32> to vector<8x96xbf16>
    %13 = vector.extract_strided_slice %12 {offsets = [0, 0], sizes = [8, 8], strides = [1, 1]} : vector<8x96xbf16> to vector<8x8xbf16>
    %14 = vector.shape_cast %13 : vector<8x8xbf16> to vector<1x8x8xbf16>
    %15 = vector.extract_strided_slice %12 {offsets = [0, 8], sizes = [8, 8], strides = [1, 1]} : vector<8x96xbf16> to vector<8x8xbf16>
    %16 = vector.shape_cast %15 : vector<8x8xbf16> to vector<1x8x8xbf16>
    %17 = vector.extract_strided_slice %12 {offsets = [0, 16], sizes = [8, 8], strides = [1, 1]} : vector<8x96xbf16> to vector<8x8xbf16>
    %18 = vector.shape_cast %17 : vector<8x8xbf16> to vector<1x8x8xbf16>
    %19 = vector.extract_strided_slice %12 {offsets = [0, 24], sizes = [8, 8], strides = [1, 1]} : vector<8x96xbf16> to vector<8x8xbf16>
    %20 = vector.shape_cast %19 : vector<8x8xbf16> to vector<1x8x8xbf16>
    %21 = vector.shape_cast %14 : vector<1x8x8xbf16> to vector<1x1x8x8xbf16>
    %22 = vector.shape_cast %16 : vector<1x8x8xbf16> to vector<1x1x8x8xbf16>
    %23 = vector.shape_cast %18 : vector<1x8x8xbf16> to vector<1x1x8x8xbf16>
    %24 = vector.shape_cast %20 : vector<1x8x8xbf16> to vector<1x1x8x8xbf16>
    %25 = tpu.concatenate %21, %22, %23, %24 in 0 : vector<1x1x8x8xbf16>, vector<1x1x8x8xbf16>, vector<1x1x8x8xbf16>, vector<1x1x8x8xbf16> -> vector<4x1x8x8xbf16>
    %26 = vector.shape_cast %25 : vector<4x1x8x8xbf16> to vector<4x8x8xbf16>
    %27 = vector.extract_strided_slice %12 {offsets = [0, 32], sizes = [8, 8], strides = [1, 1]} : vector<8x96xbf16> to vector<8x8xbf16>
    %28 = vector.shape_cast %27 : vector<8x8xbf16> to vector<1x8x8xbf16>
    %29 = vector.extract_strided_slice %12 {offsets = [0, 40], sizes = [8, 8], strides = [1, 1]} : vector<8x96xbf16> to vector<8x8xbf16>
    %30 = vector.shape_cast %29 : vector<8x8xbf16> to vector<1x8x8xbf16>
    %31 = vector.extract_strided_slice %12 {offsets = [0, 48], sizes = [8, 8], strides = [1, 1]} : vector<8x96xbf16> to vector<8x8xbf16>
    %32 = vector.shape_cast %31 : vector<8x8xbf16> to vector<1x8x8xbf16>
    %33 = vector.extract_strided_slice %12 {offsets = [0, 56], sizes = [8, 8], strides = [1, 1]} : vector<8x96xbf16> to vector<8x8xbf16>
    %34 = vector.shape_cast %33 : vector<8x8xbf16> to vector<1x8x8xbf16>
    %35 = vector.shape_cast %28 : vector<1x8x8xbf16> to vector<1x1x8x8xbf16>
    %36 = vector.shape_cast %30 : vector<1x8x8xbf16> to vector<1x1x8x8xbf16>
    %37 = vector.shape_cast %32 : vector<1x8x8xbf16> to vector<1x1x8x8xbf16>
    %38 = vector.shape_cast %34 : vector<1x8x8xbf16> to vector<1x1x8x8xbf16>
    %39 = tpu.concatenate %35, %36, %37, %38 in 0 : vector<1x1x8x8xbf16>, vector<1x1x8x8xbf16>, vector<1x1x8x8xbf16>, vector<1x1x8x8xbf16> -> vector<4x1x8x8xbf16>
    %40 = vector.shape_cast %39 : vector<4x1x8x8xbf16> to vector<4x8x8xbf16>
    %41 = vector.extract_strided_slice %12 {offsets = [0, 64], sizes = [8, 8], strides = [1, 1]} : vector<8x96xbf16> to vector<8x8xbf16>
    %42 = vector.shape_cast %41 : vector<8x8xbf16> to vector<1x8x8xbf16>
    %43 = vector.extract_strided_slice %12 {offsets = [0, 72], sizes = [8, 8], strides = [1, 1]} : vector<8x96xbf16> to vector<8x8xbf16>
    %44 = vector.shape_cast %43 : vector<8x8xbf16> to vector<1x8x8xbf16>
    %45 = vector.extract_strided_slice %12 {offsets = [0, 80], sizes = [8, 8], strides = [1, 1]} : vector<8x96xbf16> to vector<8x8xbf16>
    %46 = vector.shape_cast %45 : vector<8x8xbf16> to vector<1x8x8xbf16>
    %47 = vector.extract_strided_slice %12 {offsets = [0, 88], sizes = [8, 8], strides = [1, 1]} : vector<8x96xbf16> to vector<8x8xbf16>
    %48 = vector.shape_cast %47 : vector<8x8xbf16> to vector<1x8x8xbf16>
    %49 = vector.shape_cast %42 : vector<1x8x8xbf16> to vector<1x1x8x8xbf16>
    %50 = vector.shape_cast %44 : vector<1x8x8xbf16> to vector<1x1x8x8xbf16>
    %51 = vector.shape_cast %46 : vector<1x8x8xbf16> to vector<1x1x8x8xbf16>
    %52 = vector.shape_cast %48 : vector<1x8x8xbf16> to vector<1x1x8x8xbf16>
    %53 = tpu.concatenate %49, %50, %51, %52 in 0 : vector<1x1x8x8xbf16>, vector<1x1x8x8xbf16>, vector<1x1x8x8xbf16>, vector<1x1x8x8xbf16> -> vector<4x1x8x8xbf16>
    %54 = vector.shape_cast %53 : vector<4x1x8x8xbf16> to vector<4x8x8xbf16>
    "tpu.trace_start"() <{level = 10 : i32, message = "gqf,gkf->gqk"}> : () -> ()
    %cst_8 = arith.constant dense<0.000000e+00> : vector<4x8x8xf32>
    %55 = tpu.matmul %26, %40, %cst_8 {dimension_numbers = #tpu.dot_dimension_numbers<[2], [2], [1], [1], [0, 0, 0, 1, 1, 1], [0], [0]>} : vector<4x8x8xbf16>, vector<4x8x8xbf16>, vector<4x8x8xf32> -> vector<4x8x8xf32>
    "tpu.trace_stop"() : () -> ()
    %cst_9 = arith.constant dense<0xFF800000> : vector<4x8xf32>
    %56 = vector.multi_reduction <maximumf>, %55, %cst_9 [2] : vector<4x8x8xf32> to vector<4x8xf32>
    %57 = vector.shape_cast %56 : vector<4x8xf32> to vector<4x8x1xf32>
    %58 = vector.broadcast %57 : vector<4x8x1xf32> to vector<4x8x8xf32>
    %59 = arith.subf %55, %58 : vector<4x8x8xf32>
    %60 = math.exp %59 : vector<4x8x8xf32>
    %cst_10 = arith.constant dense<0.000000e+00> : vector<4x8xf32>
    %61 = vector.multi_reduction <add>, %60, %cst_10 [2] : vector<4x8x8xf32> to vector<4x8xf32>
    %62 = vector.shape_cast %61 : vector<4x8xf32> to vector<4x8x1xf32>
    %63 = tpu.reciprocal %62 {approx = true} : vector<4x8x1xf32> -> vector<4x8x1xf32>
    %64 = vector.broadcast %63 : vector<4x8x1xf32> to vector<4x8x8xf32>
    %65 = arith.mulf %60, %64 : vector<4x8x8xf32>
    %66 = arith.truncf %65 : vector<4x8x8xf32> to vector<4x8x8xbf16>
    "tpu.trace_start"() <{level = 10 : i32, message = "gqk,gkf->gqf"}> : () -> ()
    %cst_11 = arith.constant dense<0.000000e+00> : vector<4x8x8xf32>
    %67 = tpu.matmul %66, %54, %cst_11 {dimension_numbers = #tpu.dot_dimension_numbers<[2], [1], [1], [2], [0, 0, 0, 1, 1, 2], [0], [0]>} : vector<4x8x8xbf16>, vector<4x8x8xbf16>, vector<4x8x8xf32> -> vector<4x8x8xf32>
    "tpu.trace_stop"() : () -> ()
    %68 = arith.truncf %67 : vector<4x8x8xf32> to vector<4x8x8xbf16>
    %69 = vector.extract_strided_slice %68 {offsets = [0, 0, 0], sizes = [1, 8, 8], strides = [1, 1, 1]} : vector<4x8x8xbf16> to vector<1x8x8xbf16>
    %70 = vector.shape_cast %69 : vector<1x8x8xbf16> to vector<8x8xbf16>
    %71 = vector.extract_strided_slice %68 {offsets = [1, 0, 0], sizes = [1, 8, 8], strides = [1, 1, 1]} : vector<4x8x8xbf16> to vector<1x8x8xbf16>
    %72 = vector.shape_cast %71 : vector<1x8x8xbf16> to vector<8x8xbf16>
    %73 = vector.extract_strided_slice %68 {offsets = [2, 0, 0], sizes = [1, 8, 8], strides = [1, 1, 1]} : vector<4x8x8xbf16> to vector<1x8x8xbf16>
    %74 = vector.shape_cast %73 : vector<1x8x8xbf16> to vector<8x8xbf16>
    %75 = vector.extract_strided_slice %68 {offsets = [3, 0, 0], sizes = [1, 8, 8], strides = [1, 1, 1]} : vector<4x8x8xbf16> to vector<1x8x8xbf16>
    %76 = vector.shape_cast %75 : vector<1x8x8xbf16> to vector<8x8xbf16>
    %77 = tpu.concatenate %70, %72, %74, %76 in 1 : vector<8x8xbf16>, vector<8x8xbf16>, vector<8x8xbf16>, vector<8x8xbf16> -> vector<8x32xbf16>
    %c0_12 = arith.constant 0 : index
    %c0_13 = arith.constant 0 : index
    %c0_14 = arith.constant 0 : index
    %78 = vector.load %arg4[%c0_12, %c0_13, %c0_14] : memref<1x32x32xbf16, #tpu.memory_space<vmem>>, vector<1x32x32xbf16>
    %79 = vector.shape_cast %78 : vector<1x32x32xbf16> to vector<32x32xbf16>
    %cst_15 = arith.constant dense<0.000000e+00> : vector<8x32xf32>
    %80 = tpu.matmul %77, %79, %cst_15 {dimension_numbers = #tpu.dot_dimension_numbers<[1], [0], [0], [1], [0, 0, 1, 1], [], []>} : vector<8x32xbf16>, vector<32x32xbf16>, vector<8x32xf32> -> vector<8x32xf32>
    %c0_16 = arith.constant 0 : index
    %c0_17 = arith.constant 0 : index
    %c0_18 = arith.constant 0 : index
    %81 = vector.load %arg8[%c0_16, %c0_17, %c0_18] : memref<1x6x32xf32, #tpu.memory_space<vmem>>, vector<1x6x32xf32>
    %82 = vector.shape_cast %81 : vector<1x6x32xf32> to vector<6x32xf32>
    %83 = vector.extract_strided_slice %82 {offsets = [0, 0], sizes = [1, 32], strides = [1, 1]} : vector<6x32xf32> to vector<1x32xf32>
    %84 = vector.broadcast %83 : vector<1x32xf32> to vector<8x32xf32>
    %85 = arith.addf %80, %84 : vector<8x32xf32>
    %86 = arith.addf %3, %85 : vector<8x32xf32>
    %cst_19 = arith.constant dense<0.000000e+00> : vector<8xf32>
    %87 = vector.multi_reduction <add>, %86, %cst_19 [1] : vector<8x32xf32> to vector<8xf32>
    %88 = vector.shape_cast %87 : vector<8xf32> to vector<8x1xf32>
    %cst_20 = arith.constant 3.200000e+01 : f32
    %89 = vector.broadcast %cst_20 : f32 to vector<8x1xf32>
    %90 = arith.divf %88, %89 : vector<8x1xf32>
    %91 = vector.broadcast %90 : vector<8x1xf32> to vector<8x32xf32>
    %92 = arith.subf %86, %91 : vector<8x32xf32>
    %93 = arith.mulf %92, %92 : vector<8x32xf32>
    %cst_21 = arith.constant dense<0.000000e+00> : vector<8xf32>
    %94 = vector.multi_reduction <add>, %93, %cst_21 [1] : vector<8x32xf32> to vector<8xf32>
    %95 = vector.shape_cast %94 : vector<8xf32> to vector<8x1xf32>
    %cst_22 = arith.constant 3.200000e+01 : f32
    %96 = vector.broadcast %cst_22 : f32 to vector<8x1xf32>
    %97 = arith.divf %95, %96 : vector<8x1xf32>
    %98 = vector.broadcast %90 : vector<8x1xf32> to vector<8x32xf32>
    %99 = arith.subf %86, %98 : vector<8x32xf32>
    %cst_23 = arith.constant 9.99999974E-6 : f32
    %100 = vector.broadcast %cst_23 : f32 to vector<8x1xf32>
    %101 = arith.addf %97, %100 : vector<8x1xf32>
    %102 = math.rsqrt %101 : vector<8x1xf32>
    %103 = vector.broadcast %102 : vector<8x1xf32> to vector<8x32xf32>
    %104 = arith.mulf %99, %103 : vector<8x32xf32>
    %105 = vector.extract_strided_slice %82 {offsets = [1, 0], sizes = [1, 32], strides = [1, 1]} : vector<6x32xf32> to vector<1x32xf32>
    %106 = vector.broadcast %105 : vector<1x32xf32> to vector<8x32xf32>
    %107 = arith.mulf %104, %106 : vector<8x32xf32>
    %108 = vector.extract_strided_slice %82 {offsets = [2, 0], sizes = [1, 32], strides = [1, 1]} : vector<6x32xf32> to vector<1x32xf32>
    %109 = vector.broadcast %108 : vector<1x32xf32> to vector<8x32xf32>
    %110 = arith.addf %107, %109 : vector<8x32xf32>
    %111 = arith.truncf %110 : vector<8x32xf32> to vector<8x32xbf16>
    %c0_24 = arith.constant 0 : index
    %c0_25 = arith.constant 0 : index
    %c0_26 = arith.constant 0 : index
    %112 = vector.load %arg5[%c0_24, %c0_25, %c0_26] : memref<1x32x64xbf16, #tpu.memory_space<vmem>>, vector<1x32x64xbf16>
    %113 = vector.shape_cast %112 : vector<1x32x64xbf16> to vector<32x64xbf16>
    %cst_27 = arith.constant dense<0.000000e+00> : vector<8x64xf32>
    %114 = tpu.matmul %111, %113, %cst_27 {dimension_numbers = #tpu.dot_dimension_numbers<[1], [0], [0], [1], [0, 0, 1, 1], [], []>} : vector<8x32xbf16>, vector<32x64xbf16>, vector<8x64xf32> -> vector<8x64xf32>
    %c0_28 = arith.constant 0 : index
    %c0_29 = arith.constant 0 : index
    %c0_30 = arith.constant 0 : index
    %115 = vector.load %arg9[%c0_28, %c0_29, %c0_30] : memref<1x1x64xf32, #tpu.memory_space<vmem>>, vector<1x1x64xf32>
    %116 = vector.shape_cast %115 : vector<1x1x64xf32> to vector<1x64xf32>
    %117 = vector.broadcast %116 : vector<1x64xf32> to vector<8x64xf32>
    %118 = arith.addf %114, %117 : vector<8x64xf32>
    %cst_31 = arith.constant 0.000000e+00 : f32
    %119 = vector.broadcast %cst_31 : f32 to vector<8x64xf32>
    %120 = arith.maximumf %118, %119 : vector<8x64xf32>
    %121 = arith.truncf %120 : vector<8x64xf32> to vector<8x64xbf16>
    %c0_32 = arith.constant 0 : index
    %c0_33 = arith.constant 0 : index
    %c0_34 = arith.constant 0 : index
    %122 = vector.load %arg6[%c0_32, %c0_33, %c0_34] : memref<1x64x32xbf16, #tpu.memory_space<vmem>>, vector<1x64x32xbf16>
    %123 = vector.shape_cast %122 : vector<1x64x32xbf16> to vector<64x32xbf16>
    %cst_35 = arith.constant dense<0.000000e+00> : vector<8x32xf32>
    %124 = tpu.matmul %121, %123, %cst_35 {dimension_numbers = #tpu.dot_dimension_numbers<[1], [0], [0], [1], [0, 0, 1, 1], [], []>} : vector<8x64xbf16>, vector<64x32xbf16>, vector<8x32xf32> -> vector<8x32xf32>
    %125 = vector.extract_strided_slice %82 {offsets = [3, 0], sizes = [1, 32], strides = [1, 1]} : vector<6x32xf32> to vector<1x32xf32>
    %126 = vector.broadcast %125 : vector<1x32xf32> to vector<8x32xf32>
    %127 = arith.addf %124, %126 : vector<8x32xf32>
    %128 = arith.addf %110, %127 : vector<8x32xf32>
    %cst_36 = arith.constant dense<0.000000e+00> : vector<8xf32>
    %129 = vector.multi_reduction <add>, %128, %cst_36 [1] : vector<8x32xf32> to vector<8xf32>
    %130 = vector.shape_cast %129 : vector<8xf32> to vector<8x1xf32>
    %cst_37 = arith.constant 3.200000e+01 : f32
    %131 = vector.broadcast %cst_37 : f32 to vector<8x1xf32>
    %132 = arith.divf %130, %131 : vector<8x1xf32>
    %133 = vector.broadcast %132 : vector<8x1xf32> to vector<8x32xf32>
    %134 = arith.subf %128, %133 : vector<8x32xf32>
    %135 = arith.mulf %134, %134 : vector<8x32xf32>
    %cst_38 = arith.constant dense<0.000000e+00> : vector<8xf32>
    %136 = vector.multi_reduction <add>, %135, %cst_38 [1] : vector<8x32xf32> to vector<8xf32>
    %137 = vector.shape_cast %136 : vector<8xf32> to vector<8x1xf32>
    %cst_39 = arith.constant 3.200000e+01 : f32
    %138 = vector.broadcast %cst_39 : f32 to vector<8x1xf32>
    %139 = arith.divf %137, %138 : vector<8x1xf32>
    %140 = vector.broadcast %132 : vector<8x1xf32> to vector<8x32xf32>
    %141 = arith.subf %128, %140 : vector<8x32xf32>
    %cst_40 = arith.constant 9.99999974E-6 : f32
    %142 = vector.broadcast %cst_40 : f32 to vector<8x1xf32>
    %143 = arith.addf %139, %142 : vector<8x1xf32>
    %144 = math.rsqrt %143 : vector<8x1xf32>
    %145 = vector.broadcast %144 : vector<8x1xf32> to vector<8x32xf32>
    %146 = arith.mulf %141, %145 : vector<8x32xf32>
    %147 = vector.extract_strided_slice %82 {offsets = [4, 0], sizes = [1, 32], strides = [1, 1]} : vector<6x32xf32> to vector<1x32xf32>
    %148 = vector.broadcast %147 : vector<1x32xf32> to vector<8x32xf32>
    %149 = arith.mulf %146, %148 : vector<8x32xf32>
    %150 = vector.extract_strided_slice %82 {offsets = [5, 0], sizes = [1, 32], strides = [1, 1]} : vector<6x32xf32> to vector<1x32xf32>
    %151 = vector.broadcast %150 : vector<1x32xf32> to vector<8x32xf32>
    %152 = arith.addf %149, %151 : vector<8x32xf32>
    %c0_41 = arith.constant 0 : index
    %c0_42 = arith.constant 0 : index
    %153 = vector.load %arg10[%c0_41, %c0_42] : memref<8x32xf32, #tpu.memory_space<vmem>>, vector<8x32xf32>
    tpu.vector_store %arg10[%c0_41, %c0_42], %152 {strides = array<i32>} : memref<8x32xf32, #tpu.memory_space<vmem>>, vector<8x32xf32>,
    return
  }
  func.func @transform_0(%arg0: i32, %arg1: i32) -> (i32, i32) {
    %c0_i32 = arith.constant 0 : i32
    %c0_i32_0 = arith.constant 0 : i32
    return %arg0, %c0_i32 : i32, i32
  }
  func.func @transform_1(%arg0: i32, %arg1: i32) -> (i32, i32, i32) {
    %c0_i32 = arith.constant 0 : i32
    %c0_i32_0 = arith.constant 0 : i32
    %c0_i32_1 = arith.constant 0 : i32
    return %arg1, %c0_i32, %c0_i32_0 : i32, i32, i32
  }
  func.func @transform_2(%arg0: i32, %arg1: i32) -> (i32, i32, i32) {
    %c0_i32 = arith.constant 0 : i32
    %c0_i32_0 = arith.constant 0 : i32
    %c0_i32_1 = arith.constant 0 : i32
    return %arg1, %c0_i32, %c0_i32_0 : i32, i32, i32
  }
  func.func @transform_3(%arg0: i32, %arg1: i32) -> (i32, i32, i32) {
    %c0_i32 = arith.constant 0 : i32
    %c0_i32_0 = arith.constant 0 : i32
    %c0_i32_1 = arith.constant 0 : i32
    return %arg1, %c0_i32, %c0_i32_0 : i32, i32, i32
  }
  func.func @transform_4(%arg0: i32, %arg1: i32) -> (i32, i32, i32) {
    %c0_i32 = arith.constant 0 : i32
    %c0_i32_0 = arith.constant 0 : i32
    %c0_i32_1 = arith.constant 0 : i32
    return %arg1, %c0_i32, %c0_i32_0 : i32, i32, i32
  }
  func.func @transform_5(%arg0: i32, %arg1: i32) -> (i32, i32, i32) {
    %c0_i32 = arith.constant 0 : i32
    %c0_i32_0 = arith.constant 0 : i32
    %c0_i32_1 = arith.constant 0 : i32
    return %arg1, %c0_i32, %c0_i32_0 : i32, i32, i32
  }
  func.func @transform_6(%arg0: i32, %arg1: i32) -> (i32, i32, i32) {
    %c0_i32 = arith.constant 0 : i32
    %c0_i32_0 = arith.constant 0 : i32
    %c0_i32_1 = arith.constant 0 : i32
    return %arg1, %c0_i32, %c0_i32_0 : i32, i32, i32
  }
  func.func @transform_7(%arg0: i32, %arg1: i32) -> (i32, i32, i32) {
    %c0_i32 = arith.constant 0 : i32
    %c0_i32_0 = arith.constant 0 : i32
    %c0_i32_1 = arith.constant 0 : i32
    return %arg1, %c0_i32, %c0_i32_0 : i32, i32, i32
  }
  func.func @transform_8(%arg0: i32, %arg1: i32) -> (i32, i32) {
    %c0_i32 = arith.constant 0 : i32
    %c0_i32_0 = arith.constant 0 : i32
    return %arg0, %c0_i32 : i32, i32
  }
}

</mosaic_0001>

<llo_original>
// kernel: transformer_encoder_wrapper.1
$region0: #{transformer_encoder_wrapper.1}
  #allocation0 [shape = 'u32[]', space=smem, size = 0x4, offset = 0x4, fixed_abs, tag = 'smem constant byte address 0x4 - core index']
  #allocation1 [shape = 'u32[72,128]{1,0:T(1,128)}', space=vmem, size = 0x9000, scoped, tag = 'internal scratch']
  %s0 = inlined_call_operand.vmem [shape: f32[16,32], index: 0, kind: input, shape index: {}, may-alias: {0,8}]
  %s1 = inlined_call_operand.hbm [shape: bf16[2,32,96], index: 1, kind: input, shape index: {}]
  %s2 = inlined_call_operand.hbm [shape: bf16[2,32,32], index: 2, kind: input, shape index: {}]
  %s3 = inlined_call_operand.hbm [shape: bf16[2,32,64], index: 3, kind: input, shape index: {}]
  %s4 = inlined_call_operand.vmem [shape: bf16[2,64,32], index: 4, kind: input, shape index: {}]
  %s5 = inlined_call_operand.hbm [shape: f32[2,1,96], index: 5, kind: input, shape index: {}]
  %s6 = inlined_call_operand.vmem [shape: f32[2,6,32], index: 6, kind: input, shape index: {}]
  %s7 = inlined_call_operand.hbm [shape: f32[2,1,64], index: 7, kind: input, shape index: {}]
  %s8 = inlined_call_operand.vmem [shape: f32[16,32], index: 8, kind: output, shape index: {}, may-alias: {0,8}]
  %s9 = sld [smem:[#allocation0]]
  $region89: #{transformer_encoder_wrapper.1} parent=0
    _
  %s11 = ssub.s32 1, %s9
  %s12 = scalar_select 0, %s11, %s9
  $region1: #{transformer_encoder_wrapper.1} parent=0
    #allocation2 [shape = 'u8[16384]{0}', space=vmem, size = 0x4000, scoped, tag = 'input window, operand 1']
    #allocation3 [shape = 's32[2]{0}', space=sflag, size = 0x8, scoped, tag = 'scoped memory for transformer_encoder_wrapper.1']
    #allocation4 [shape = 'u8[16384]{0}', space=vmem, size = 0x4000, scoped, tag = 'input window, operand 2']
    #allocation5 [shape = 's32[2]{0}', space=sflag, size = 0x8, scoped, tag = 'scoped memory for transformer_encoder_wrapper.1']
    #allocation6 [shape = 'u8[16384]{0}', space=vmem, size = 0x4000, scoped, tag = 'input window, operand 3']
    #allocation7 [shape = 'u8[1024]{0}', space=vmem, size = 0x400, scoped, tag = 'input window, operand 5']
    #allocation8 [shape = 's32[2]{0}', space=sflag, size = 0x8, scoped, tag = 'scoped memory for transformer_encoder_wrapper.1']
    #allocation9 [shape = 'u8[1024]{0}', space=vmem, size = 0x400, scoped, tag = 'input window, operand 7']
    %13 = vsyncpa [#allocation3], 0
    %s14 = scalar_lea.sflag [#allocation3], 1
    %15 = vsyncpa %s14, 0
    %16 = vsyncpa [#allocation5], 0
    %s17 = scalar_lea.sflag [#allocation5], 1
    %18 = vsyncpa %s17, 0
    %19 = vsyncpa [#allocation8], 0
    %s20 = scalar_lea.sflag [#allocation8], 1
    %21 = vsyncpa %s20, 0
    loop: start=0, step=1, limit=6
    $region2: #{transformer_encoder_wrapper.1} parent=1 // loop_pre_header
      _
    $region3: #{transformer_encoder_wrapper.1} parent=1 // loop_header
      %s23 = sphi 0, %s27
      %p24 = scmp.ge.s32.totalorder %s23, 6
      %s30 = sphi 0, %s42
      %s31 = sphi 0, %s38
      %s32 = sphi 0, %s30
      %s33 = sphi 0, %s31
      %s34 = sphi 0, %s32
      %s35 = sphi 0, %s33
      %s45 = sphi 0, %s47
      %s48 = sphi 0, %s45
      %s49 = sphi 0, %s48
      %s65 = sphi 0, %s49
      %s71 = sphi 0, %s73
      %s74 = sphi 0, %s71
      %s75 = sphi 0, %s74
      %s91 = sphi 0, %s75
      %s97 = sphi 0, %s99
      %s100 = sphi 0, %s97
      %s101 = sphi 0, %s100
      %s117 = sphi 0, %s101
      %s123 = sphi 0, %s125
      %s126 = sphi 0, %s123
      %s127 = sphi 0, %s126
      %s143 = sphi 0, %s127
      %s149 = sphi 0, %s151
      %s152 = sphi 0, %s149
      %s153 = sphi 0, %s152
      %s169 = sphi 0, %s153
      %s175 = sphi 0, %s177
      %s178 = sphi 0, %s175
      %s179 = sphi 0, %s178
      %s195 = sphi 0, %s179
      %s201 = sphi 0, %s203
      %s204 = sphi 0, %s201
      %s205 = sphi 0, %s204
      %s221 = sphi 0, %s205
      %s227 = sphi 0, %s229
      %s230 = sphi 0, %s227
      %s231 = sphi 0, %s230
      %s247 = sphi 0, %s231
      %s253 = sphi 0, %s255
      %s256 = sphi 0, %s253
      %s257 = sphi 0, %s256
      %s273 = sphi 0, %s257
    $region4: #{transformer_encoder_wrapper.1} parent=1 // loop_header_branch
      %26 = sbr.rel (%p24) target = $region8
    $region5: #{transformer_encoder_wrapper.1} parent=1 // loop_body
      %s28 = ssub.s32 %s23, 1
      %s29 = ssub.s32 %s23, 2
      %s36 = sadd.s32 1, %s31
      %p37 = scmp.ge.s32.totalorder %s36, 2
      %s38 = scalar_select %p37, 0, %s36
      %s39 = sadd.s32 1, %s30
      %s40 = scalar_select %p37, %s39, %s30
      %p41 = scmp.ge.s32.totalorder %s40, 2
      %s42 = scalar_select %p41, 0, %s40
      %s43 = ssub.s32 %s30, %s42
      %p44 = scmp.eq.s32.totalorder %s43, 0
      %s46 = sadd.s32 %s45, 1
      %s47 = scalar_select %p44, %s45, %s46
      %p50 = pneg %p44
      %p51 = scmp.eq.s32.totalorder %s23, 3
      %p52 = por %p50, %p51
      %p53 = scmp.ne.s32.totalorder %s45, %s48
      %p54 = scmp.eq.s32.totalorder %s23, 0
      %p55 = por %p53, %p54
      %p56 = scmp.ne.s32.totalorder %s45, %s48
      %p57 = scmp.eq.s32.totalorder %s28, 3
      %p58 = por %p56, %p57
      %p59 = scmp.ne.s32.totalorder %s48, %s49
      %p60 = scmp.eq.s32.totalorder %s28, 0
      %p61 = por %p59, %p60
      %p62 = scmp.ne.s32.totalorder %s48, %s49
      %p63 = scmp.eq.s32.totalorder %s29, 3
      %p64 = por %p62, %p63
      %p66 = scmp.ne.s32.totalorder %s49, %s65
      %p67 = scmp.eq.s32.totalorder %s29, 0
      %p68 = por %p66, %p67
      %s69 = ssub.s32 %s31, %s38
      %p70 = scmp.eq.s32.totalorder %s69, 0
      %s72 = sadd.s32 %s71, 1
      %s73 = scalar_select %p70, %s71, %s72
      %p76 = pneg %p70
      %p77 = scmp.eq.s32.totalorder %s23, 3
      %p78 = por %p76, %p77
      %p79 = scmp.ne.s32.totalorder %s71, %s74
      %p80 = scmp.eq.s32.totalorder %s23, 0
      %p81 = por %p79, %p80
      %p82 = scmp.ne.s32.totalorder %s71, %s74
      %p83 = scmp.eq.s32.totalorder %s28, 3
      %p84 = por %p82, %p83
      %p85 = scmp.ne.s32.totalorder %s74, %s75
      %p86 = scmp.eq.s32.totalorder %s28, 0
      %p87 = por %p85, %p86
      %p88 = scmp.ne.s32.totalorder %s74, %s75
      %p89 = scmp.eq.s32.totalorder %s29, 3
      %p90 = por %p88, %p89
      %p92 = scmp.ne.s32.totalorder %s75, %s91
      %p93 = scmp.eq.s32.totalorder %s29, 0
      %p94 = por %p92, %p93
      %s95 = ssub.s32 %s31, %s38
      %p96 = scmp.eq.s32.totalorder %s95, 0
      %s98 = sadd.s32 %s97, 1
      %s99 = scalar_select %p96, %s97, %s98
      %p102 = pneg %p96
      %p103 = scmp.eq.s32.totalorder %s23, 3
      %p104 = por %p102, %p103
      %p105 = scmp.ne.s32.totalorder %s97, %s100
      %p106 = scmp.eq.s32.totalorder %s23, 0
      %p107 = por %p105, %p106
      %p108 = scmp.ne.s32.totalorder %s97, %s100
      %p109 = scmp.eq.s32.totalorder %s28, 3
      %p110 = por %p108, %p109
      %p111 = scmp.ne.s32.totalorder %s100, %s101
      %p112 = scmp.eq.s32.totalorder %s28, 0
      %p113 = por %p111, %p112
      %p114 = scmp.ne.s32.totalorder %s100, %s101
      %p115 = scmp.eq.s32.totalorder %s29, 3
      %p116 = por %p114, %p115
      %p118 = scmp.ne.s32.totalorder %s101, %s117
      %p119 = scmp.eq.s32.totalorder %s29, 0
      %p120 = por %p118, %p119
      %s121 = ssub.s32 %s31, %s38
      %p122 = scmp.eq.s32.totalorder %s121, 0
      %s124 = sadd.s32 %s123, 1
      %s125 = scalar_select %p122, %s123, %s124
      %p128 = pneg %p122
      %p129 = scmp.eq.s32.totalorder %s23, 3
      %p130 = por %p128, %p129
      %p131 = scmp.ne.s32.totalorder %s123, %s126
      %p132 = scmp.eq.s32.totalorder %s23, 0
      %p133 = por %p131, %p132
      %p134 = scmp.ne.s32.totalorder %s123, %s126
      %p135 = scmp.eq.s32.totalorder %s28, 3
      %p136 = por %p134, %p135
      %p137 = scmp.ne.s32.totalorder %s126, %s127
      %p138 = scmp.eq.s32.totalorder %s28, 0
      %p139 = por %p137, %p138
      %p140 = scmp.ne.s32.totalorder %s126, %s127
      %p141 = scmp.eq.s32.totalorder %s29, 3
      %p142 = por %p140, %p141
      %p144 = scmp.ne.s32.totalorder %s127, %s143
      %p145 = scmp.eq.s32.totalorder %s29, 0
      %p146 = por %p144, %p145
      %s147 = ssub.s32 %s31, %s38
      %p148 = scmp.eq.s32.totalorder %s147, 0
      %s150 = sadd.s32 %s149, 1
      %s151 = scalar_select %p148, %s149, %s150
      %p154 = pneg %p148
      %p155 = scmp.eq.s32.totalorder %s23, 3
      %p156 = por %p154, %p155
      %p157 = scmp.ne.s32.totalorder %s149, %s152
      %p158 = scmp.eq.s32.totalorder %s23, 0
      %p159 = por %p157, %p158
      %p160 = scmp.ne.s32.totalorder %s149, %s152
      %p161 = scmp.eq.s32.totalorder %s28, 3
      %p162 = por %p160, %p161
      %p163 = scmp.ne.s32.totalorder %s152, %s153
      %p164 = scmp.eq.s32.totalorder %s28, 0
      %p165 = por %p163, %p164
      %p166 = scmp.ne.s32.totalorder %s152, %s153
      %p167 = scmp.eq.s32.totalorder %s29, 3
      %p168 = por %p166, %p167
      %p170 = scmp.ne.s32.totalorder %s153, %s169
      %p171 = scmp.eq.s32.totalorder %s29, 0
      %p172 = por %p170, %p171
      %s173 = ssub.s32 %s31, %s38
      %p174 = scmp.eq.s32.totalorder %s173, 0
      %s176 = sadd.s32 %s175, 1
      %s177 = scalar_select %p174, %s175, %s176
      %p180 = pneg %p174
      %p181 = scmp.eq.s32.totalorder %s23, 3
      %p182 = por %p180, %p181
      %p183 = scmp.ne.s32.totalorder %s175, %s178
      %p184 = scmp.eq.s32.totalorder %s23, 0
      %p185 = por %p183, %p184
      %p186 = scmp.ne.s32.totalorder %s175, %s178
      %p187 = scmp.eq.s32.totalorder %s28, 3
      %p188 = por %p186, %p187
      %p189 = scmp.ne.s32.totalorder %s178, %s179
      %p190 = scmp.eq.s32.totalorder %s28, 0
      %p191 = por %p189, %p190
      %p192 = scmp.ne.s32.totalorder %s178, %s179
      %p193 = scmp.eq.s32.totalorder %s29, 3
      %p194 = por %p192, %p193
      %p196 = scmp.ne.s32.totalorder %s179, %s195
      %p197 = scmp.eq.s32.totalorder %s29, 0
      %p198 = por %p196, %p197
      %s199 = ssub.s32 %s31, %s38
      %p200 = scmp.eq.s32.totalorder %s199, 0
      %s202 = sadd.s32 %s201, 1
      %s203 = scalar_select %p200, %s201, %s202
      %p206 = pneg %p200
      %p207 = scmp.eq.s32.totalorder %s23, 3
      %p208 = por %p206, %p207
      %p209 = scmp.ne.s32.totalorder %s201, %s204
      %p210 = scmp.eq.s32.totalorder %s23, 0
      %p211 = por %p209, %p210
      %p212 = scmp.ne.s32.totalorder %s201, %s204
      %p213 = scmp.eq.s32.totalorder %s28, 3
      %p214 = por %p212, %p213
      %p215 = scmp.ne.s32.totalorder %s204, %s205
      %p216 = scmp.eq.s32.totalorder %s28, 0
      %p217 = por %p215, %p216
      %p218 = scmp.ne.s32.totalorder %s204, %s205
      %p219 = scmp.eq.s32.totalorder %s29, 3
      %p220 = por %p218, %p219
      %p222 = scmp.ne.s32.totalorder %s205, %s221
      %p223 = scmp.eq.s32.totalorder %s29, 0
      %p224 = por %p222, %p223
      %s225 = ssub.s32 %s31, %s38
      %p226 = scmp.eq.s32.totalorder %s225, 0
      %s228 = sadd.s32 %s227, 1
      %s229 = scalar_select %p226, %s227, %s228
      %p232 = pneg %p226
      %p233 = scmp.eq.s32.totalorder %s23, 3
      %p234 = por %p232, %p233
      %p235 = scmp.ne.s32.totalorder %s227, %s230
      %p236 = scmp.eq.s32.totalorder %s23, 0
      %p237 = por %p235, %p236
      %p238 = scmp.ne.s32.totalorder %s227, %s230
      %p239 = scmp.eq.s32.totalorder %s28, 3
      %p240 = por %p238, %p239
      %p241 = scmp.ne.s32.totalorder %s230, %s231
      %p242 = scmp.eq.s32.totalorder %s28, 0
      %p243 = por %p241, %p242
      %p244 = scmp.ne.s32.totalorder %s230, %s231
      %p245 = scmp.eq.s32.totalorder %s29, 3
      %p246 = por %p244, %p245
      %p248 = scmp.ne.s32.totalorder %s231, %s247
      %p249 = scmp.eq.s32.totalorder %s29, 0
      %p250 = por %p248, %p249
      %s251 = ssub.s32 %s30, %s42
      %p252 = scmp.eq.s32.totalorder %s251, 0
      %s254 = sadd.s32 %s253, 1
      %s255 = scalar_select %p252, %s253, %s254
      %p258 = pneg %p252
      %p259 = scmp.eq.s32.totalorder %s23, 3
      %p260 = por %p258, %p259
      %p261 = scmp.ne.s32.totalorder %s253, %s256
      %p262 = scmp.eq.s32.totalorder %s23, 0
      %p263 = por %p261, %p262
      %p264 = scmp.ne.s32.totalorder %s253, %s256
      %p265 = scmp.eq.s32.totalorder %s28, 3
      %p266 = por %p264, %p265
      %p267 = scmp.ne.s32.totalorder %s256, %s257
      %p268 = scmp.eq.s32.totalorder %s28, 0
      %p269 = por %p267, %p268
      %p270 = scmp.ne.s32.totalorder %s256, %s257
      %p271 = scmp.eq.s32.totalorder %s29, 3
      %p272 = por %p270, %p271
      %p274 = scmp.ne.s32.totalorder %s257, %s273
      %p275 = scmp.eq.s32.totalorder %s29, 0
      %p276 = por %p274, %p275
      %p277 = scmp.le.s32.totalorder 1, %s23
      %p278 = scmp.lt.s32.totalorder %s23, 5
      %p279 = pnand %p277, %p278
      %p280 = pneg %p279
      // Predicated region
      $region9: #{transformer_encoder_wrapper.1} parent=5 // pred_check
        _
      $region10: #{transformer_encoder_wrapper.1} parent=5 // pred_check_branch
        %282 = sbr.rel (%p279) target = $region12
      $region11: #{transformer_encoder_wrapper.1} parent=5 // pred_region
        %s283 = ssub.s32 %s23, 1
      $region12: #{transformer_encoder_wrapper.1} parent=5 // pred_fallthru
        _
      %p284 = scmp.lt.s32.totalorder %s23, 4
      // Predicated region
      $region13: #{transformer_encoder_wrapper.1} parent=5 // pred_check
        %p285 = pneg %p284
      $region14: #{transformer_encoder_wrapper.1} parent=5 // pred_check_branch
        %287 = sbr.rel (%p285) target = $region16
      $region15: #{transformer_encoder_wrapper.1} parent=5 // pred_region
        // Predicated region
        $region17: #{transformer_encoder_wrapper.1} parent=15 // pred_check
          %p288 = pneg %p55
        $region18: #{transformer_encoder_wrapper.1} parent=15 // pred_check_branch
          %290 = sbr.rel (%p288) target = $region20
        $region19: #{transformer_encoder_wrapper.1} parent=15 // pred_region
          %p291 = scmp.lt.s32.totalorder %s30, 1
          %s292 = scalar_select %p291, %s30, 1
          %s293 = smul.addr %s292, 8
          %s294 = scalar_lea.vmem %s0, %s293
        $region20: #{transformer_encoder_wrapper.1} parent=15 // pred_fallthru
          _
        // Predicated region
        $region21: #{transformer_encoder_wrapper.1} parent=15 // pred_check
          %p295 = pneg %p81
        $region22: #{transformer_encoder_wrapper.1} parent=15 // pred_check_branch
          %297 = sbr.rel (%p295) target = $region24
        $region23: #{transformer_encoder_wrapper.1} parent=15 // pred_region
          %s298 = sand.u32 %s71, 1
          %s299 = scalar_lea.sflag [#allocation3], %s298
          %s300 = sand.u32 %s71, 1
          %s301 = smul.addr %s300, 16
          %s302 = scalar_lea.vmem [#allocation2], %s301
          %304 = vsyncadd %s299, 0
          %s305 = smul.addr %s31, 4
          %s306 = smul.addr %s305, 4
          %s307 = scalar_lea.hbm %s1, %s306
          %s308 = sshll.u32 %s307, 4
          %s309 = int_to_ptr.hbm [resolvable:$true] %s308
          %s310 = sshll.u32 %s302, 4
          %s311 = int_to_ptr.vmem [resolvable:$true] %s310
          %316 = dma.hbm_to_vmem [thread:$0]  %s309, 256, %s311, %s299, 64, 64, 4
        $region24: #{transformer_encoder_wrapper.1} parent=15 // pred_fallthru
          _
        // Predicated region
        $region25: #{transformer_encoder_wrapper.1} parent=15 // pred_check
          %p317 = pneg %p107
        $region26: #{transformer_encoder_wrapper.1} parent=15 // pred_check_branch
          %319 = sbr.rel (%p317) target = $region28
        $region27: #{transformer_encoder_wrapper.1} parent=15 // pred_region
          %s320 = sand.u32 %s23, 1
          %s321 = scalar_lea.sflag [#allocation5], %s320
          %s322 = sand.u32 %s97, 1
          %s323 = smul.addr %s322, 16
          %s324 = scalar_lea.vmem [#allocation4], %s323
          %326 = vsyncadd %s321, 0
          %s327 = smul.addr %s31, 4
          %s328 = smul.addr %s327, 4
          %s329 = scalar_lea.hbm %s2, %s328
          %s330 = sshll.u32 %s329, 4
          %s331 = int_to_ptr.hbm [resolvable:$true] %s330
          %s332 = sshll.u32 %s324, 4
          %s333 = int_to_ptr.vmem [resolvable:$true] %s332
          %338 = dma.hbm_to_vmem [thread:$0]  %s331, 256, %s333, %s321, 64, 64, 4
        $region28: #{transformer_encoder_wrapper.1} parent=15 // pred_fallthru
          _
        // Predicated region
        $region29: #{transformer_encoder_wrapper.1} parent=15 // pred_check
          %p339 = pneg %p133
        $region30: #{transformer_encoder_wrapper.1} parent=15 // pred_check_branch
          %341 = sbr.rel (%p339) target = $region32
        $region31: #{transformer_encoder_wrapper.1} parent=15 // pred_region
          %s342 = sand.u32 %s23, 1
          %s343 = scalar_lea.sflag [#allocation5], %s342
          %s344 = sand.u32 %s123, 1
          %s345 = smul.addr %s344, 16
          %s346 = scalar_lea.vmem [#allocation6], %s345
          %348 = vsyncadd %s343, 0
          %s349 = smul.addr %s31, 4
          %s350 = smul.addr %s349, 4
          %s351 = scalar_lea.hbm %s3, %s350
          %s352 = sshll.u32 %s351, 4
          %s353 = int_to_ptr.hbm [resolvable:$true] %s352
          %s354 = sshll.u32 %s346, 4
          %s355 = int_to_ptr.vmem [resolvable:$true] %s354
          %360 = dma.hbm_to_vmem [thread:$0]  %s353, 256, %s355, %s343, 64, 64, 4
        $region32: #{transformer_encoder_wrapper.1} parent=15 // pred_fallthru
          _
        // Predicated region
        $region33: #{transformer_encoder_wrapper.1} parent=15 // pred_check
          %p361 = pneg %p159
        $region34: #{transformer_encoder_wrapper.1} parent=15 // pred_check_branch
          %363 = sbr.rel (%p361) target = $region36
        $region35: #{transformer_encoder_wrapper.1} parent=15 // pred_region
          %p364 = scmp.lt.s32.totalorder %s31, 1
          %s365 = scalar_select %p364, %s31, 1
          %s366 = smul.addr %s365, 8
          %s367 = smul.addr %s366, 4
          %s368 = scalar_lea.vmem %s4, %s367
        $region36: #{transformer_encoder_wrapper.1} parent=15 // pred_fallthru
          _
        // Predicated region
        $region37: #{transformer_encoder_wrapper.1} parent=15 // pred_check
          %p369 = pneg %p185
        $region38: #{transformer_encoder_wrapper.1} parent=15 // pred_check_branch
          %371 = sbr.rel (%p369) target = $region40
        $region39: #{transformer_encoder_wrapper.1} parent=15 // pred_region
          %s372 = sand.u32 %s23, 1
          %s373 = scalar_lea.sflag [#allocation8], %s372
          %s374 = sand.u32 %s175, 1
          %s375 = scalar_lea.vmem [#allocation7], %s374
          %377 = vsyncadd %s373, 0
          %s378 = scalar_lea.hbm %s5, %s31
          %s380 = sshll.u32 %s378, 4
          %s381 = int_to_ptr.hbm [resolvable:$true] %s380
          %s382 = sshll.u32 %s375, 4
          %s383 = int_to_ptr.vmem [resolvable:$true] %s382
          %385 = dma.hbm_to_vmem [thread:$0]  %s381, 16, %s383, %s373
        $region40: #{transformer_encoder_wrapper.1} parent=15 // pred_fallthru
          _
        // Predicated region
        $region41: #{transformer_encoder_wrapper.1} parent=15 // pred_check
          %p386 = pneg %p211
        $region42: #{transformer_encoder_wrapper.1} parent=15 // pred_check_branch
          %388 = sbr.rel (%p386) target = $region44
        $region43: #{transformer_encoder_wrapper.1} parent=15 // pred_region
          %p389 = scmp.lt.s32.totalorder %s31, 1
          %s390 = scalar_select %p389, %s31, 1
          %s391 = smul.addr %s390, 8
          %s392 = scalar_lea.vmem %s6, %s391
        $region44: #{transformer_encoder_wrapper.1} parent=15 // pred_fallthru
          _
        // Predicated region
        $region45: #{transformer_encoder_wrapper.1} parent=15 // pred_check
          %p393 = pneg %p237
        $region46: #{transformer_encoder_wrapper.1} parent=15 // pred_check_branch
          %395 = sbr.rel (%p393) target = $region48
        $region47: #{transformer_encoder_wrapper.1} parent=15 // pred_region
          %s396 = sand.u32 %s23, 1
          %s397 = scalar_lea.sflag [#allocation8], %s396
          %s398 = sand.u32 %s227, 1
          %s399 = scalar_lea.vmem [#allocation9], %s398
          %401 = vsyncadd %s397, 0
          %s402 = scalar_lea.hbm %s7, %s31
          %s404 = sshll.u32 %s402, 4
          %s405 = int_to_ptr.hbm [resolvable:$true] %s404
          %s406 = sshll.u32 %s399, 4
          %s407 = int_to_ptr.vmem [resolvable:$true] %s406
          %409 = dma.hbm_to_vmem [thread:$0]  %s405, 16, %s407, %s397
        $region48: #{transformer_encoder_wrapper.1} parent=15 // pred_fallthru
          _
      $region16: #{transformer_encoder_wrapper.1} parent=5 // pred_fallthru
        _
      %p410 = scmp.le.s32.totalorder 1, %s23
      %p411 = scmp.lt.s32.totalorder %s23, 5
      %p412 = pnand %p410, %p411
      %p413 = pneg %p412
      // Predicated region
      $region49: #{transformer_encoder_wrapper.1} parent=5 // pred_check
        _
      $region50: #{transformer_encoder_wrapper.1} parent=5 // pred_check_branch
        %415 = sbr.rel (%p412) target = $region52
      $region51: #{transformer_encoder_wrapper.1} parent=5 // pred_region
        %s416 = ssub.s32 %s23, 1
        %s417 = sand.u32 %s74, 1
        %s418 = scalar_lea.sflag [#allocation3], %s417
        %s419 = sand.u32 %s74, 1
        %s420 = smul.addr %s419, 16
        %s421 = scalar_lea.vmem [#allocation2], %s420
        // Predicated region
        $region53: #{transformer_encoder_wrapper.1} parent=51 // pred_check
          %p422 = pneg %p87
        $region54: #{transformer_encoder_wrapper.1} parent=51 // pred_check_branch
          %424 = sbr.rel (%p422) target = $region56
        $region55: #{transformer_encoder_wrapper.1} parent=51 // pred_region
          %426 = dma.done %s418, 256
        $region56: #{transformer_encoder_wrapper.1} parent=51 // pred_fallthru
          _
        %s427 = sand.u32 %s28, 1
        %s428 = scalar_lea.sflag [#allocation5], %s427
        %s429 = sand.u32 %s100, 1
        %s430 = smul.addr %s429, 16
        %s431 = scalar_lea.vmem [#allocation4], %s430
        // Predicated region
        $region57: #{transformer_encoder_wrapper.1} parent=51 // pred_check
          %p432 = pneg %p113
        $region58: #{transformer_encoder_wrapper.1} parent=51 // pred_check_branch
          %434 = sbr.rel (%p432) target = $region60
        $region59: #{transformer_encoder_wrapper.1} parent=51 // pred_region
          %436 = dma.done %s428, 256
        $region60: #{transformer_encoder_wrapper.1} parent=51 // pred_fallthru
          _
        %s437 = sand.u32 %s28, 1
        %s438 = scalar_lea.sflag [#allocation5], %s437
        %s439 = sand.u32 %s126, 1
        %s440 = smul.addr %s439, 16
        %s441 = scalar_lea.vmem [#allocation6], %s440
        // Predicated region
        $region61: #{transformer_encoder_wrapper.1} parent=51 // pred_check
          %p442 = pneg %p139
        $region62: #{transformer_encoder_wrapper.1} parent=51 // pred_check_branch
          %444 = sbr.rel (%p442) target = $region64
        $region63: #{transformer_encoder_wrapper.1} parent=51 // pred_region
          %446 = dma.done %s438, 256
        $region64: #{transformer_encoder_wrapper.1} parent=51 // pred_fallthru
          _
        %s447 = sand.u32 %s28, 1
        %s448 = scalar_lea.sflag [#allocation8], %s447
        %s449 = sand.u32 %s178, 1
        %s450 = scalar_lea.vmem [#allocation7], %s449
        // Predicated region
        $region65: #{transformer_encoder_wrapper.1} parent=51 // pred_check
          %p451 = pneg %p191
        $region66: #{transformer_encoder_wrapper.1} parent=51 // pred_check_branch
          %453 = sbr.rel (%p451) target = $region68
        $region67: #{transformer_encoder_wrapper.1} parent=51 // pred_region
          %455 = dma.done %s448, 16
        $region68: #{transformer_encoder_wrapper.1} parent=51 // pred_fallthru
          _
        %s456 = sand.u32 %s28, 1
        %s457 = scalar_lea.sflag [#allocation8], %s456
        %s458 = sand.u32 %s230, 1
        %s459 = scalar_lea.vmem [#allocation9], %s458
        // Predicated region
        $region69: #{transformer_encoder_wrapper.1} parent=51 // pred_check
          %p460 = pneg %p243
        $region70: #{transformer_encoder_wrapper.1} parent=51 // pred_check_branch
          %462 = sbr.rel (%p460) target = $region72
        $region71: #{transformer_encoder_wrapper.1} parent=51 // pred_region
          %464 = dma.done %s457, 16
        $region72: #{transformer_encoder_wrapper.1} parent=51 // pred_fallthru
          _
        %p465 = scmp.lt.s32.totalorder %s32, 1
        %s466 = scalar_select %p465, %s32, 1
        %s467 = smul.addr %s466, 8
        %s468 = scalar_lea.vmem %s0, %s467
        %p469 = pneg %p61
        %p470 = pneg %p58
        %s471 = sand.u32 %s74, 1
        %s472 = scalar_lea.sflag [#allocation3], %s471
        %s473 = sand.u32 %s74, 1
        %s474 = smul.addr %s473, 16
        %s475 = scalar_lea.vmem [#allocation2], %s474
        %p476 = pneg %p87
        %p477 = pneg %p84
        %s478 = sand.u32 %s28, 1
        %s479 = scalar_lea.sflag [#allocation5], %s478
        %s480 = sand.u32 %s100, 1
        %s481 = smul.addr %s480, 16
        %s482 = scalar_lea.vmem [#allocation4], %s481
        %p483 = pneg %p113
        %p484 = pneg %p110
        %s485 = sand.u32 %s28, 1
        %s486 = scalar_lea.sflag [#allocation5], %s485
        %s487 = sand.u32 %s126, 1
        %s488 = smul.addr %s487, 16
        %s489 = scalar_lea.vmem [#allocation6], %s488
        %p490 = pneg %p139
        %p491 = pneg %p136
        %p492 = scmp.lt.s32.totalorder %s33, 1
        %s493 = scalar_select %p492, %s33, 1
        %s494 = smul.addr %s493, 8
        %s495 = smul.addr %s494, 4
        %s496 = scalar_lea.vmem %s4, %s495
        %p497 = pneg %p165
        %p498 = pneg %p162
        %s499 = sand.u32 %s28, 1
        %s500 = scalar_lea.sflag [#allocation8], %s499
        %s501 = sand.u32 %s178, 1
        %s502 = scalar_lea.vmem [#allocation7], %s501
        %p503 = pneg %p191
        %p504 = pneg %p188
        %p505 = scmp.lt.s32.totalorder %s33, 1
        %s506 = scalar_select %p505, %s33, 1
        %s507 = smul.addr %s506, 8
        %s508 = scalar_lea.vmem %s6, %s507
        %p509 = pneg %p217
        %p510 = pneg %p214
        %s511 = sand.u32 %s28, 1
        %s512 = scalar_lea.sflag [#allocation8], %s511
        %s513 = sand.u32 %s230, 1
        %s514 = scalar_lea.vmem [#allocation9], %s513
        %p515 = pneg %p243
        %p516 = pneg %p240
        %p517 = pneg %p269
        %p518 = pneg %p266
        %p519 = scmp.lt.s32.totalorder %s32, 1
        %s520 = scalar_select %p519, %s32, 1
        %s521 = smul.addr %s520, 8
        %s522 = scalar_lea.vmem %s8, %s521
        %p523 = scmp.lt.s32.totalorder %s32, 1
        %s524 = scalar_select %p523, %s32, 1
        %s525 = smul.addr %s524, 8
        %s526 = scalar_lea.vmem %s0, %s525
        %p527 = scmp.lt.s32.totalorder %s33, 1
        %s528 = scalar_select %p527, %s33, 1
        %s529 = smul.addr %s528, 8
        %s530 = smul.addr %s529, 4
        %s531 = scalar_lea.vmem %s4, %s530
        %p532 = scmp.lt.s32.totalorder %s33, 1
        %s533 = scalar_select %p532, %s33, 1
        %s534 = smul.addr %s533, 8
        %s535 = scalar_lea.vmem %s6, %s534
        %p536 = scmp.lt.s32.totalorder %s32, 1
        %s537 = scalar_select %p536, %s32, 1
        %s538 = smul.addr %s537, 8
        %s539 = scalar_lea.vmem %s8, %s538
        %p541 = scmp.eq.s32.totalorder %s33, 0
        // Predicated region
        $region73: #{transformer_encoder_wrapper.1} parent=51 // pred_check
          %p542 = pneg %p541
        $region74: #{transformer_encoder_wrapper.1} parent=51 // pred_check_branch
          %544 = sbr.rel (%p542) target = $region76
        $region75: #{transformer_encoder_wrapper.1} parent=51 // pred_region
          %v545 = vld [vmem:[%s526] sm:$0xff]
          %vm546 = vcmask 261120
          %547 = vst.msk [vmem:[%s539] sm:$0xff] %vm546, %v545
        $region76: #{transformer_encoder_wrapper.1} parent=51 // pred_fallthru
          _
        %v548 = vld [vmem:[%s539] sm:$0xff]
        %v549 = vpack.c.bf16 %v548, %v548
        %v550 = vld [vmem:[%s421] sm:$0xf]
        %v551 = vld [vmem:[%s421 + $0x4] sm:$0xf]
        %v552 = vld [vmem:[%s421 + $0x8] sm:$0xf]
        %v553 = vld [vmem:[%s421 + $0xc] sm:$0xf]
        %v554 = vld [vmem:[%s450] sm:$0x1]
        %v556 = vperm.slane %v554, 0
        %v562 = vunpack.c.l.b16 %v550
        %v563 = vunpack.c.l.b16 %v551
        %v564 = vunpack.c.l.b16 %v552
        %v565 = vunpack.c.l.b16 %v553
        %v566 = vpack.c.b16 %v563, %v562
        %v567 = vpack.c.b16 %v565, %v564
        %vm570 = vcmask 261120
        %v572 = vsel %vm570, %v549, 0
        %574 = vmatpush.bf16.msra.mxu0 0
        %575 = vmatpush.bf16.msra.mxu0 0
        %576 = vmatpush.bf16.msra.mxu0 0
        %577 = vmatpush.bf16.msra.mxu0 0
        %578 = vmatpush.bf16.msra.mxu0 0
        %579 = vmatpush.bf16.msra.mxu0 0
        %580 = vmatpush.bf16.msra.mxu0 %v567
        %581 = vmatpush.bf16.msra.mxu0 %v566
        %582 = vmatmul.bf16.gmra.mxu0 %v572
        %v583 = vpop.f32.mrf.mxu0
        %v584 = vadd.f32 %v556, %v583
        %v585 = vpop.f32.mrf.mxu0
        %586 = vdwg.mxu0
        %v587 = vpack.c.bf16 %v584, %v584
        %589 = vrot.lane.b32.xlu0 %v587, 120
        %v590 = vpop.permute.xlu0 %589
        %591 = vrot.lane.b32.xlu0 %v587, 112
        %v592 = vpop.permute.xlu0 %591
        %593 = vrot.lane.b32.xlu0 %v587, 104
        %v594 = vpop.permute.xlu0 %593
        %v595 = vunpack.c.l.b16 %v587
        %v596 = vpack.c.b16 %v595, %v595
        %597 = vrot.lane.b32.xlu0 %v596, 96
        %v598 = vpop.permute.xlu0 %597
        %vm599 = vcmask 64512
        %v601 = vsel %vm599, %v587, 0
        %v604 = vsel %vm599, %v598, 0
        %606 = vmatpush.bf16.xpose.msra.mxu0 0
        %607 = vmatpush.bf16.xpose.msra.mxu0 0
        %608 = vmatpush.bf16.xpose.msra.mxu0 0
        %609 = vmatpush.bf16.xpose.msra.mxu0 0
        %610 = vmatpush.bf16.xpose.msra.mxu0 0
        %611 = vmatpush.bf16.xpose.msra.mxu0 0
        %612 = vmatpush.bf16.xpose.msra.mxu0 0
        %613 = vmatpush.bf16.xpose.msra.mxu0 %v604
        %614 = vmatmul.bf16.gmra.mxu0 %v601
        %v615 = vpop.f32.mrf.mxu0
        %v616 = vadd.f32 0.0, %v615
        %v617 = vpop.f32.mrf.mxu0
        %618 = vdwg.mxu0
        %v619 = vunpack.c.l.b16 %v590
        %v620 = vpack.c.b16 %v619, %v619
        %621 = vrot.lane.b32.xlu0 %v620, 96
        %v622 = vpop.permute.xlu0 %621
        %v624 = vsel %vm599, %v590, 0
        %v627 = vsel %vm599, %v622, 0
        %629 = vmatpush.bf16.xpose.msra.mxu0 0
        %630 = vmatpush.bf16.xpose.msra.mxu0 0
        %631 = vmatpush.bf16.xpose.msra.mxu0 0
        %632 = vmatpush.bf16.xpose.msra.mxu0 0
        %633 = vmatpush.bf16.xpose.msra.mxu0 0
        %634 = vmatpush.bf16.xpose.msra.mxu0 0
        %635 = vmatpush.bf16.xpose.msra.mxu0 0
        %636 = vmatpush.bf16.xpose.msra.mxu0 %v627
        %637 = vmatmul.bf16.gmra.mxu0 %v624
        %v638 = vpop.f32.mrf.mxu0
        %v639 = vadd.f32 0.0, %v638
        %v640 = vpop.f32.mrf.mxu0
        %641 = vdwg.mxu0
        %v642 = vunpack.c.l.b16 %v592
        %v643 = vpack.c.b16 %v642, %v642
        %644 = vrot.lane.b32.xlu0 %v643, 96
        %v645 = vpop.permute.xlu0 %644
        %v647 = vsel %vm599, %v592, 0
        %v650 = vsel %vm599, %v645, 0
        %652 = vmatpush.bf16.xpose.msra.mxu0 0
        %653 = vmatpush.bf16.xpose.msra.mxu0 0
        %654 = vmatpush.bf16.xpose.msra.mxu0 0
        %655 = vmatpush.bf16.xpose.msra.mxu0 0
        %656 = vmatpush.bf16.xpose.msra.mxu0 0
        %657 = vmatpush.bf16.xpose.msra.mxu0 0
        %658 = vmatpush.bf16.xpose.msra.mxu0 0
        %659 = vmatpush.bf16.xpose.msra.mxu0 %v650
        %660 = vmatmul.bf16.gmra.mxu0 %v647
        %v661 = vpop.f32.mrf.mxu0
        %v662 = vadd.f32 0.0, %v661
        %v663 = vpop.f32.mrf.mxu0
        %664 = vdwg.mxu0
        %v665 = vunpack.c.l.b16 %v594
        %v666 = vpack.c.b16 %v665, %v665
        %667 = vrot.lane.b32.xlu0 %v666, 96
        %v668 = vpop.permute.xlu0 %667
        %v670 = vsel %vm599, %v594, 0
        %v673 = vsel %vm599, %v668, 0
        %675 = vmatpush.bf16.xpose.msra.mxu0 0
        %676 = vmatpush.bf16.xpose.msra.mxu0 0
        %677 = vmatpush.bf16.xpose.msra.mxu0 0
        %678 = vmatpush.bf16.xpose.msra.mxu0 0
        %679 = vmatpush.bf16.xpose.msra.mxu0 0
        %680 = vmatpush.bf16.xpose.msra.mxu0 0
        %681 = vmatpush.bf16.xpose.msra.mxu0 0
        %682 = vmatpush.bf16.xpose.msra.mxu0 %v673
        %683 = vmatmul.bf16.gmra.mxu0 %v670
        %v684 = vpop.f32.mrf.mxu0
        %v685 = vadd.f32 0.0, %v684
        %v686 = vpop.f32.mrf.mxu0
        %687 = vdwg.mxu0
        %v688 = vsel %vm599, %v616, -inf
        %689 = vmax.xlane.f32.xlu0 %v688
        %v690 = vpop.xlane.xlu0 %689
        %v691 = vsel %vm599, %v639, -inf
        %692 = vmax.xlane.f32.xlu0 %v691
        %v693 = vpop.xlane.xlu0 %692
        %v694 = vsel %vm599, %v662, -inf
        %695 = vmax.xlane.f32.xlu0 %v694
        %v696 = vpop.xlane.xlu0 %695
        %v697 = vsel %vm599, %v685, -inf
        %698 = vmax.xlane.f32.xlu0 %v697
        %v699 = vpop.xlane.xlu0 %698
        %v700 = vsub.f32 %v616, %v690
        %v701 = vsub.f32 %v639, %v693
        %v702 = vsub.f32 %v662, %v696
        %v703 = vsub.f32 %v685, %v699
        %v704 = vmul.f32 %v700, 1.442695
        %v705 = vpow.pop %v704
        %v706 = vmul.f32 %v701, 1.442695
        %v707 = vpow.pop %v706
        %v708 = vmul.f32 %v702, 1.442695
        %v709 = vpow.pop %v708
        %v710 = vmul.f32 %v703, 1.442695
        %v711 = vpow.pop %v710
        %v712 = vsel %vm599, %v705, 0.0
        %713 = vadd.xlane.f32.xlu0 %v712
        %v714 = vpop.xlane.xlu0 %713
        %v715 = vsel %vm599, %v707, 0.0
        %716 = vadd.xlane.f32.xlu0 %v715
        %v717 = vpop.xlane.xlu0 %716
        %v718 = vsel %vm599, %v709, 0.0
        %719 = vadd.xlane.f32.xlu0 %v718
        %v720 = vpop.xlane.xlu0 %719
        %v721 = vsel %vm599, %v711, 0.0
        %722 = vadd.xlane.f32.xlu0 %v721
        %v723 = vpop.xlane.xlu0 %722
        %v724 = vrcp.pop %v714
        %v725 = vrcp.pop %v717
        %v726 = vrcp.pop %v720
        %v727 = vrcp.pop %v723
        %v728 = vmul.f32 %v705, %v724
        %v729 = vmul.f32 %v707, %v725
        %v730 = vmul.f32 %v709, %v726
        %v731 = vmul.f32 %v711, %v727
        %v732 = vpack.c.bf16 %v728, %v728
        %v733 = vpack.c.bf16 %v729, %v729
        %v734 = vpack.c.bf16 %v730, %v730
        %v735 = vpack.c.bf16 %v731, %v731
        %736 = vrot.lane.b32.xlu0 %v596, 64
        %v737 = vpop.permute.xlu0 %736
        %v739 = vsel %vm599, %v732, 0
        %vm741 = vcmask 1043456
        %v743 = vsel %vm741, %v737, 0
        %745 = vmatpush.bf16.msra.mxu0 0
        %746 = vmatpush.bf16.msra.mxu0 0
        %747 = vmatpush.bf16.msra.mxu0 0
        %748 = vmatpush.bf16.msra.mxu0 0
        %749 = vmatpush.bf16.msra.mxu0 0
        %750 = vmatpush.bf16.msra.mxu0 0
        %751 = vmatpush.bf16.msra.mxu0 0
        %752 = vmatpush.bf16.msra.mxu0 %v743
        %753 = vmatmul.bf16.gmra.mxu0 %v739
        %v754 = vpop.f32.mrf.mxu0
        %v755 = vadd.f32 0.0, %v754
        %v756 = vpop.f32.mrf.mxu0
        %757 = vdwg.mxu0
        %758 = vrot.lane.b32.xlu0 %v620, 64
        %v759 = vpop.permute.xlu0 %758
        %v761 = vsel %vm599, %v733, 0
        %v764 = vsel %vm741, %v759, 0
        %766 = vmatpush.bf16.msra.mxu0 0
        %767 = vmatpush.bf16.msra.mxu0 0
        %768 = vmatpush.bf16.msra.mxu0 0
        %769 = vmatpush.bf16.msra.mxu0 0
        %770 = vmatpush.bf16.msra.mxu0 0
        %771 = vmatpush.bf16.msra.mxu0 0
        %772 = vmatpush.bf16.msra.mxu0 0
        %773 = vmatpush.bf16.msra.mxu0 %v764
        %774 = vmatmul.bf16.gmra.mxu0 %v761
        %v775 = vpop.f32.mrf.mxu0
        %v776 = vadd.f32 0.0, %v775
        %v777 = vpop.f32.mrf.mxu0
        %778 = vdwg.mxu0
        %779 = vrot.lane.b32.xlu0 %v643, 64
        %v780 = vpop.permute.xlu0 %779
        %v782 = vsel %vm599, %v734, 0
        %v785 = vsel %vm741, %v780, 0
        %787 = vmatpush.bf16.msra.mxu0 0
        %788 = vmatpush.bf16.msra.mxu0 0
        %789 = vmatpush.bf16.msra.mxu0 0
        %790 = vmatpush.bf16.msra.mxu0 0
        %791 = vmatpush.bf16.msra.mxu0 0
        %792 = vmatpush.bf16.msra.mxu0 0
        %793 = vmatpush.bf16.msra.mxu0 0
        %794 = vmatpush.bf16.msra.mxu0 %v785
        %795 = vmatmul.bf16.gmra.mxu0 %v782
        %v796 = vpop.f32.mrf.mxu0
        %v797 = vadd.f32 0.0, %v796
        %v798 = vpop.f32.mrf.mxu0
        %799 = vdwg.mxu0
        %800 = vrot.lane.b32.xlu0 %v666, 64
        %v801 = vpop.permute.xlu0 %800
        %v803 = vsel %vm599, %v735, 0
        %v806 = vsel %vm741, %v801, 0
        %808 = vmatpush.bf16.msra.mxu0 0
        %809 = vmatpush.bf16.msra.mxu0 0
        %810 = vmatpush.bf16.msra.mxu0 0
        %811 = vmatpush.bf16.msra.mxu0 0
        %812 = vmatpush.bf16.msra.mxu0 0
        %813 = vmatpush.bf16.msra.mxu0 0
        %814 = vmatpush.bf16.msra.mxu0 0
        %815 = vmatpush.bf16.msra.mxu0 %v806
        %816 = vmatmul.bf16.gmra.mxu0 %v803
        %v817 = vpop.f32.mrf.mxu0
        %v818 = vadd.f32 0.0, %v817
        %v819 = vpop.f32.mrf.mxu0
        %820 = vdwg.mxu0
        %v821 = vpack.c.bf16 %v755, %v755
        %v822 = vpack.c.bf16 %v776, %v776
        %v823 = vpack.c.bf16 %v797, %v797
        %v824 = vpack.c.bf16 %v818, %v818
        %v826 = vunpack.c.l.b16 %v822
        %v827 = vpack.c.b16 %v826, %v826
        %828 = vrot.lane.b32.xlu0 %v827, 8
        %v829 = vpop.permute.xlu0 %828
        %v831 = vunpack.c.l.b16 %v823
        %v832 = vpack.c.b16 %v831, %v831
        %833 = vrot.lane.b32.xlu0 %v832, 16
        %v834 = vpop.permute.xlu0 %833
        %v836 = vunpack.c.l.b16 %v824
        %v837 = vpack.c.b16 %v836, %v836
        %838 = vrot.lane.b32.xlu0 %v837, 24
        %v839 = vpop.permute.xlu0 %838
        %v842 = vsel %vm599, %v821, %v829
        %vm843 = vcmask 130048
        %v845 = vsel %vm843, %v842, %v834
        %vm846 = vcmask 195584
        %v848 = vsel %vm846, %v845, %v839
        %v849 = vld [vmem:[%s431] sm:$0xf]
        %v850 = vld [vmem:[%s431 + $0x4] sm:$0xf]
        %v851 = vld [vmem:[%s431 + $0x8] sm:$0xf]
        %v852 = vld [vmem:[%s431 + $0xc] sm:$0xf]
        %v853 = vld [vmem:[%s535] sm:$0x3f]
        %v854 = vperm.slane %v853, 0
        %v859 = vunpack.c.l.b16 %v849
        %v860 = vunpack.c.l.b16 %v850
        %v861 = vunpack.c.l.b16 %v851
        %v862 = vunpack.c.l.b16 %v852
        %v863 = vpack.c.b16 %v860, %v859
        %v864 = vpack.c.b16 %v862, %v861
        %v867 = vsel %vm570, %v848, 0
        %869 = vmatpush.bf16.msra.mxu0 0
        %870 = vmatpush.bf16.msra.mxu0 0
        %871 = vmatpush.bf16.msra.mxu0 0
        %872 = vmatpush.bf16.msra.mxu0 0
        %873 = vmatpush.bf16.msra.mxu0 0
        %874 = vmatpush.bf16.msra.mxu0 0
        %875 = vmatpush.bf16.msra.mxu0 %v864
        %876 = vmatpush.bf16.msra.mxu0 %v863
        %877 = vmatmul.bf16.gmra.mxu0 %v867
        %v878 = vpop.f32.mrf.mxu0
        %v879 = vadd.f32 %v854, %v878
        %v880 = vpop.f32.mrf.mxu0
        %881 = vdwg.mxu0
        %v882 = vadd.f32 %v548, %v879
        %v883 = vsel %vm570, %v882, 0.0
        %884 = vadd.xlane.f32.xlu0 %v883
        %v885 = vpop.xlane.xlu0 %884
        %v886 = vrcp.pop 32.0
        %v887 = vmul.f32 32.0, %v886
        %v888 = vsub.f32 1.0, %v887
        %v889 = vmul.f32 %v886, %v888
        %v890 = vadd.f32 %v886, %v889
        %vm891 = vweird.f32 %v886
        %v892 = vsel %vm891, %v886, %v890
        %v893 = vmul.f32 %v885, %v892
        %v894 = vsub.f32 %v882, %v893
        %v895 = vmul.f32 %v894, %v894
        %v896 = vsel %vm570, %v895, 0.0
        %897 = vadd.xlane.f32.xlu0 %v896
        %v898 = vpop.xlane.xlu0 %897
        %v899 = vmul.f32 %v898, %v892
        %v900 = vadd.f32 %v899, 1e-05
        %v901 = vrsqrt.pop %v900
        %v902 = vmul.f32 %v901, %v900
        %v903 = vmul.f32 %v902, %v901
        %v904 = vmul.f32 0.5, %v903
        %v905 = vsub.f32 1.5, %v904
        %v906 = vmul.f32 %v901, %v905
        %vm907 = vweird.f32 %v900
        %vm908 = vweird.f32 %v901
        %vm909 = vmor %vm907, %vm908
        %v910 = vsel %vm909, %v901, %v906
        %v911 = vmul.f32 %v894, %v910
        %v912 = vperm.slane %v853, 1
        %v913 = vmul.f32 %v911, %v912
        %v914 = vperm.slane %v853, 2
        %v915 = vadd.f32 %v913, %v914
        %v916 = vpack.c.bf16 %v915, %v915
        %v917 = vld [vmem:[%s441] sm:$0xf]
        %v918 = vld [vmem:[%s441 + $0x4] sm:$0xf]
        %v919 = vld [vmem:[%s441 + $0x8] sm:$0xf]
        %v920 = vld [vmem:[%s441 + $0xc] sm:$0xf]
        %v921 = vld [vmem:[%s459] sm:$0x1]
        %v923 = vperm.slane %v921, 0
        %v929 = vunpack.c.l.b16 %v917
        %v930 = vunpack.c.l.b16 %v918
        %v931 = vunpack.c.l.b16 %v919
        %v932 = vunpack.c.l.b16 %v920
        %v933 = vpack.c.b16 %v930, %v929
        %v934 = vpack.c.b16 %v932, %v931
        %v938 = vsel %vm570, %v916, 0
        %940 = vmatpush.bf16.msra.mxu0 0
        %941 = vmatpush.bf16.msra.mxu0 0
        %942 = vmatpush.bf16.msra.mxu0 0
        %943 = vmatpush.bf16.msra.mxu0 0
        %944 = vmatpush.bf16.msra.mxu0 0
        %945 = vmatpush.bf16.msra.mxu0 0
        %946 = vmatpush.bf16.msra.mxu0 %v934
        %947 = vmatpush.bf16.msra.mxu0 %v933
        %948 = vmatmul.bf16.gmra.mxu0 %v938
        %v949 = vpop.f32.mrf.mxu0
        %v950 = vadd.f32 %v923, %v949
        %v951 = vpop.f32.mrf.mxu0
        %952 = vdwg.mxu0
        %v953 = vmax.f32 %v950, 0.0
        %v954 = vpack.c.bf16 %v953, %v953
        %v955 = vld [vmem:[%s531] sm:$0xf]
        %v956 = vld [vmem:[%s531 + $0x4] sm:$0xf]
        %v957 = vld [vmem:[%s531 + $0x8] sm:$0xf]
        %v958 = vld [vmem:[%s531 + $0xc] sm:$0xf]
        %v959 = vld [vmem:[%s531 + $0x10] sm:$0xf]
        %v960 = vld [vmem:[%s531 + $0x14] sm:$0xf]
        %v961 = vld [vmem:[%s531 + $0x18] sm:$0xf]
        %v962 = vld [vmem:[%s531 + $0x1c] sm:$0xf]
        %v963 = vperm.slane %v853, 3
        %v972 = vunpack.c.l.b16 %v955
        %v973 = vunpack.c.l.b16 %v956
        %v974 = vunpack.c.l.b16 %v957
        %v975 = vunpack.c.l.b16 %v958
        %v976 = vunpack.c.l.b16 %v959
        %v977 = vunpack.c.l.b16 %v960
        %v978 = vunpack.c.l.b16 %v961
        %v979 = vunpack.c.l.b16 %v962
        %v980 = vpack.c.b16 %v973, %v972
        %v981 = vpack.c.b16 %v975, %v974
        %v982 = vpack.c.b16 %v977, %v976
        %v983 = vpack.c.b16 %v979, %v978
        %vm988 = vcmask 523264
        %v990 = vsel %vm988, %v954, 0
        %992 = vmatpush.bf16.msra.mxu0 0
        %993 = vmatpush.bf16.msra.mxu0 0
        %994 = vmatpush.bf16.msra.mxu0 0
        %995 = vmatpush.bf16.msra.mxu0 0
        %996 = vmatpush.bf16.msra.mxu0 %v983
        %997 = vmatpush.bf16.msra.mxu0 %v982
        %998 = vmatpush.bf16.msra.mxu0 %v981
        %999 = vmatpush.bf16.msra.mxu0 %v980
        %1000 = vmatmul.bf16.gmra.mxu0 %v990
        %v1001 = vpop.f32.mrf.mxu0
        %v1002 = vadd.f32 %v963, %v1001
        %v1003 = vpop.f32.mrf.mxu0
        %1004 = vdwg.mxu0
        %v1005 = vadd.f32 %v915, %v1002
        %v1006 = vsel %vm570, %v1005, 0.0
        %1007 = vadd.xlane.f32.xlu0 %v1006
        %v1008 = vpop.xlane.xlu0 %1007
        %v1009 = vmul.f32 %v1008, %v892
        %v1010 = vsub.f32 %v1005, %v1009
        %v1011 = vmul.f32 %v1010, %v1010
        %v1012 = vsel %vm570, %v1011, 0.0
        %1013 = vadd.xlane.f32.xlu0 %v1012
        %v1014 = vpop.xlane.xlu0 %1013
        %v1015 = vmul.f32 %v1014, %v892
        %v1016 = vadd.f32 %v1015, 1e-05
        %v1017 = vrsqrt.pop %v1016
        %v1018 = vmul.f32 %v1017, %v1016
        %v1019 = vmul.f32 %v1018, %v1017
        %v1020 = vmul.f32 0.5, %v1019
        %v1021 = vsub.f32 1.5, %v1020
        %v1022 = vmul.f32 %v1017, %v1021
        %vm1023 = vweird.f32 %v1016
        %vm1024 = vweird.f32 %v1017
        %vm1025 = vmor %vm1023, %vm1024
        %v1026 = vsel %vm1025, %v1017, %v1022
        %v1027 = vmul.f32 %v1010, %v1026
        %v1028 = vperm.slane %v853, 4
        %v1029 = vmul.f32 %v1027, %v1028
        %v1030 = vperm.slane %v853, 5
        %v1031 = vadd.f32 %v1029, %v1030
        %1032 = vst.msk [vmem:[%s539] sm:$0xff] %vm570, %v1031
        %p1033 = scmp.lt.s32.totalorder %s32, 1
        %s1034 = scalar_select %p1033, %s32, 1
        %s1035 = smul.addr %s1034, 8
        %s1036 = scalar_lea.vmem %s8, %s1035
        // Predicated region
        $region77: #{transformer_encoder_wrapper.1} parent=51 // pred_check
          %p1037 = pneg %p266
        $region78: #{transformer_encoder_wrapper.1} parent=51 // pred_check_branch
          %1039 = sbr.rel (%p1037) target = $region80
        $region79: #{transformer_encoder_wrapper.1} parent=51 // pred_region
          _
        $region80: #{transformer_encoder_wrapper.1} parent=51 // pred_fallthru
          _
      $region52: #{transformer_encoder_wrapper.1} parent=5 // pred_fallthru
        _
      %p1040 = scmp.le.s32.totalorder 2, %s23
      // Predicated region
      $region81: #{transformer_encoder_wrapper.1} parent=5 // pred_check
        %p1041 = pneg %p1040
      $region82: #{transformer_encoder_wrapper.1} parent=5 // pred_check_branch
        %1043 = sbr.rel (%p1041) target = $region84
      $region83: #{transformer_encoder_wrapper.1} parent=5 // pred_region
        %s1044 = ssub.s32 %s23, 2
        // Predicated region
        $region85: #{transformer_encoder_wrapper.1} parent=83 // pred_check
          %p1045 = pneg %p272
        $region86: #{transformer_encoder_wrapper.1} parent=83 // pred_check_branch
          %1047 = sbr.rel (%p1045) target = $region88
        $region87: #{transformer_encoder_wrapper.1} parent=83 // pred_region
          %p1048 = scmp.lt.s32.totalorder %s34, 1
          %s1049 = scalar_select %p1048, %s34, 1
          %s1050 = smul.addr %s1049, 8
          %s1051 = scalar_lea.vmem %s8, %s1050
        $region88: #{transformer_encoder_wrapper.1} parent=83 // pred_fallthru
          _
      $region84: #{transformer_encoder_wrapper.1} parent=5 // pred_fallthru
        _
    $region6: #{transformer_encoder_wrapper.1} parent=1 // loop_footer
      %s27 = sadd.s32 1, %s23
    $region7: #{transformer_encoder_wrapper.1} parent=1 // loop_footer_branch
      %22 = sbr.rel target = $region3
    $region8: #{transformer_encoder_wrapper.1} parent=1 // loop_exit
      _
    %1052 = vsyncpa [#allocation3], 1
    %s1053 = scalar_lea.sflag [#allocation3], 1
    %1054 = vsyncpa %s1053, 1
    %1055 = vsyncpa [#allocation5], 1
    %s1056 = scalar_lea.sflag [#allocation5], 1
    %1057 = vsyncpa %s1056, 1
    %1058 = vsyncpa [#allocation8], 1
    %s1059 = scalar_lea.sflag [#allocation8], 1
    %1060 = vsyncpa %s1059, 1

</llo_original>
